<compile_context>
chip_gen: v7x
topology: tpu7x:2x2x1
jax: 0.10.0
libtpu: 0.0.40
codegen_flags: <defaults>
</compile_context>

<pallas_src>
import math

import jax
import jax.numpy as jnp
from jax.experimental import pallas as pl
from jax.experimental.pallas import tpu as pltpu


# --------------------------------------------------------------------------
# Kernel
# --------------------------------------------------------------------------
def _mlp_kernel(x_ref, w1_ref, b1_ref, w2_ref, b2_ref, w3_ref, b3_ref, out_ref):
    d_total = x_ref.shape[1]
    half = d_total // 2

    x = x_ref[...]                                   # (TB, D_total) f32
    # omega columns (kept in f32; they multiply zero rows of w1f in fc1).
    omega0 = x[:, half - 1:half]                     # (TB, 1)
    omega1 = x[:, d_total - 1:d_total]               # (TB, 1)

    # fc1 + tanh   (bf16 MXU, f32 accumulate)
    h1 = jnp.tanh(
        jnp.dot(x.astype(jnp.bfloat16), w1_ref[...],
                preferred_element_type=jnp.float32) + b1_ref[...]
    )                                                # (TB, H_pad) f32

    # fc2 + tanh + residual
    h2 = jnp.tanh(
        jnp.dot(h1.astype(jnp.bfloat16), w2_ref[...],
                preferred_element_type=jnp.float32) + b2_ref[...]
    ) + h1                                           # (TB, H_pad) f32

    # Folded 2-class head: d = logit0 - logit1 via elementwise mul + lane
    # reduce (XLU), sigmoid via exp (EUP) + approx reciprocal (EUP).
    d = jnp.sum(h2 * w3_ref[...], axis=-1, keepdims=True) + b3_ref[...]  # (TB,1)
    p0 = pl.reciprocal(1.0 + jnp.exp(-d), approx=True)                   # sigmoid(d)

    # softmax([l0,l1]) . omega  ==  omega1 + (omega0-omega1)*sigmoid(l0-l1)
    out_ref[...] = omega1 + (omega0 - omega1) * p0


# --------------------------------------------------------------------------
# Wrapper
# --------------------------------------------------------------------------
def model1_fc_iswap_forward(x, kernel_params, *, block_b=512):
    """x: (B, D_total) f32, D_total even. Returns (B, 1) f32.

    block_b: batch tile size. Larger tiles (512-2048) amortize the ~0.35us
    per-grid-step overhead (most important on v5e, where this kernel is
    HBM-bound); smaller tiles just demonstrate more pipeline stages.
    """
    B, D_total = x.shape
    assert D_total % 2 == 0
    w1f, b1f, w2f, b2f, w3d, b3d = kernel_params
    assert w1f.shape[0] == D_total, "folded w1 must cover the full input width"
    h_pad = w1f.shape[1]

    TB = min(block_b, max(8, B))
    # Round TB down to a multiple of 8 (sublane) for clean tiling.
    TB = max(8, (TB // 8) * 8)
    n_tiles = pl.cdiv(B, TB)
    B_pad = n_tiles * TB
    if B_pad != B:
        # Only glue left in the wrapper: pad the batch to a tile multiple.
        x = jnp.pad(x, ((0, B_pad - B), (0, 0)))

    out = pl.pallas_call(
        _mlp_kernel,
        out_shape=jax.ShapeDtypeStruct((B_pad, 1), jnp.float32),
        grid_spec=pltpu.PrefetchScalarGridSpec(
            num_scalar_prefetch=0,
            grid=(n_tiles,),
            in_specs=[
                # batch-tiled activations
                pl.BlockSpec((TB, D_total), lambda i: (i, 0)),
                # weights / biases: constant index map -> fetched once,
                # resident in VMEM across all batch tiles.
                pl.BlockSpec((D_total, h_pad), lambda i: (0, 0)),
                pl.BlockSpec((1, h_pad), lambda i: (0, 0)),
                pl.BlockSpec((h_pad, h_pad), lambda i: (0, 0)),
                pl.BlockSpec((1, h_pad), lambda i: (0, 0)),
                pl.BlockSpec((1, h_pad), lambda i: (0, 0)),
                pl.BlockSpec((1, 1), lambda i: (0, 0)),
            ],
            out_specs=pl.BlockSpec((TB, 1), lambda i: (i, 0)),
        ),
        compiler_params=pltpu.CompilerParams(
            dimension_semantics=("parallel",),
        ),
    )(x, w1f, b1f, w2f, b2f, w3d, b3d)

    return out[:B]


# --------------------------------------------------------------------------
# Parameter construction
# --------------------------------------------------------------------------
def init_params(key, d_in, hidden):
    """Raw parameters mimicking nn.Linear init (uniform +/- 1/sqrt(fan_in)).
    Weights stored transposed: (in_features, out_features)."""
    ks = jax.random.split(key, 6)

    def lin(kw, kb, fan_in, fan_out):
        bound = 1.0 / math.sqrt(fan_in)
        w = jax.random.uniform(kw, (fan_in, fan_out), jnp.float32, -bound, bound)
        b = jax.random.uniform(kb, (fan_out,), jnp.float32, -bound, bound)
        return w, b

    w1, b1 = lin(ks[0], ks[1], d_in, hidden)
    w2, b2 = lin(ks[2], ks[3], hidden, hidden)
    w3, b3 = lin(ks[4], ks[5], hidden, 2)
    return (w1, b1, w2, b2, w3, b3)


def fold_params(raw_params, d_total):
    """Fold the feature/omega split into fc1 (zero rows at the two omega
    positions), pad hidden to a multiple of 128, fold the 2-class head into a
    single difference vector, and cast the big matmul weights to bf16."""
    w1, b1, w2, b2, w3, b3 = raw_params
    d_in, hidden = w1.shape
    assert d_in == d_total - 2
    half = d_total // 2
    h_pad = max(128, ((hidden + 127) // 128) * 128)

    # fc1 folded to full input width; rows (half-1) and (d_total-1) -- the
    # omega columns of x -- must stay exactly zero.
    w1f = jnp.zeros((d_total, h_pad), jnp.float32)
    w1f = w1f.at[0:half - 1, :hidden].set(w1[0:half - 1])
    w1f = w1f.at[half:d_total - 1, :hidden].set(w1[half - 1:])
    b1f = jnp.zeros((1, h_pad), jnp.float32).at[0, :hidden].set(b1)

    w2f = jnp.zeros((h_pad, h_pad), jnp.float32).at[:hidden, :hidden].set(w2)
    b2f = jnp.zeros((1, h_pad), jnp.float32).at[0, :hidden].set(b2)

    # Two-class head folded to a single row vector (logit0 - logit1).
    w3d = jnp.zeros((1, h_pad), jnp.float32).at[0, :hidden].set(w3[:, 0] - w3[:, 1])
    b3d = jnp.asarray(b3[0] - b3[1], jnp.float32).reshape(1, 1)

    return (w1f.astype(jnp.bfloat16), b1f,
            w2f.astype(jnp.bfloat16), b2f,
            w3d, b3d)


# --------------------------------------------------------------------------
# Pure-JAX reference (f32, identical semantics to the PyTorch module)
# --------------------------------------------------------------------------
def reference_forward(x, raw_params):
    w1, b1, w2, b2, w3, b3 = raw_params
    B, D_total = x.shape
    half = D_total // 2
    x3 = x.reshape(B, 2, half)
    omega = x3[:, :, -1]
    xf = x3[:, :, :-1].reshape(B, -1)
    h1 = jnp.tanh(xf @ w1 + b1)
    h2 = jnp.tanh(h1 @ w2 + b2) + h1
    logits = h2 @ w3 + b3
    p = jax.nn.softmax(logits, axis=-1)
    return jnp.sum(p * omega, axis=-1, keepdims=True)


# --------------------------------------------------------------------------
if __name__ == "__main__":
    key = jax.random.PRNGKey(0)
    k_x, k_p = jax.random.split(key)

    B = 512          # 4 batch tiles at TB=128 -> exercises the pipeline/grid
    D_total = 32     # even; fc1 input features = D_total - 2 = 30
    hidden = 32      # padded to 128 inside fold_params

    x = jax.random.normal(k_x, (B, D_total), dtype=jnp.float32)
    raw_params = init_params(k_p, D_total - 2, hidden)
    kernel_params = fold_params(raw_params, D_total)

    out = model1_fc_iswap_forward(x, kernel_params, block_b=128)
    out = jax.block_until_ready(out)

    ref = reference_forward(x, raw_params)
    assert out.shape == (B, 1)
    # bf16 matmuls + approx reciprocal -> relaxed tolerance vs f32 reference.
    assert jnp.allclose(out, ref, atol=2e-2, rtol=2e-2), (
        float(jnp.max(jnp.abs(out - ref))))

    print("KERNEL_OK")
</pallas_src>

<mosaic_0001>
module attributes {stable_mosaic.version = 11 : i64} {
  func.func @_mlp_kernel(%arg0: i32, %arg1: memref<128x32xf32, #tpu.memory_space<vmem>>, %arg2: memref<32x128xbf16, #tpu.memory_space<vmem>>, %arg3: memref<1x128xf32, #tpu.memory_space<vmem>>, %arg4: memref<128x128xbf16, #tpu.memory_space<vmem>>, %arg5: memref<1x128xf32, #tpu.memory_space<vmem>>, %arg6: memref<1x128xf32, #tpu.memory_space<vmem>>, %arg7: memref<1x1xf32, #tpu.memory_space<vmem>>, %arg8: memref<128x1xf32, #tpu.memory_space<vmem>>) attributes {dimension_semantics = [#tpu.dimension_semantics<parallel>], iteration_bounds = array<i64: 4>, scalar_prefetch = 0 : i64, scratch_operands = 0 : i64, tpu.core_type = #tpu.core_type<tc>, window_params = [{transform_indices = @transform_0, window_bounds = array<i64: 128, 32>}, {pipeline_mode = #tpu.pipeline_mode<synchronous>, transform_indices = @transform_1, window_bounds = array<i64: 32, 128>}, {pipeline_mode = #tpu.pipeline_mode<synchronous>, transform_indices = @transform_2, window_bounds = array<i64: 1, 128>}, {pipeline_mode = #tpu.pipeline_mode<synchronous>, transform_indices = @transform_3, window_bounds = array<i64: 128, 128>}, {pipeline_mode = #tpu.pipeline_mode<synchronous>, transform_indices = @transform_4, window_bounds = array<i64: 1, 128>}, {pipeline_mode = #tpu.pipeline_mode<synchronous>, transform_indices = @transform_5, window_bounds = array<i64: 1, 128>}, {pipeline_mode = #tpu.pipeline_mode<synchronous>, transform_indices = @transform_6, window_bounds = array<i64: 1, 1>}, {transform_indices = @transform_7, window_bounds = array<i64: 128, 1>}]} {
    %c0 = arith.constant 0 : index
    %c0_0 = arith.constant 0 : index
    %0 = vector.load %arg1[%c0, %c0_0] : memref<128x32xf32, #tpu.memory_space<vmem>>, vector<128x32xf32>
    %1 = vector.extract_strided_slice %0 {offsets = [0, 15], sizes = [128, 1], strides = [1, 1]} : vector<128x32xf32> to vector<128x1xf32>
    %2 = vector.extract_strided_slice %0 {offsets = [0, 31], sizes = [128, 1], strides = [1, 1]} : vector<128x32xf32> to vector<128x1xf32>
    %3 = arith.truncf %0 : vector<128x32xf32> to vector<128x32xbf16>
    %c0_1 = arith.constant 0 : index
    %c0_2 = arith.constant 0 : index
    %4 = vector.load %arg2[%c0_1, %c0_2] : memref<32x128xbf16, #tpu.memory_space<vmem>>, vector<32x128xbf16>
    %cst = arith.constant dense<0.000000e+00> : vector<128x128xf32>
    %5 = tpu.matmul %3, %4, %cst {dimension_numbers = #tpu.dot_dimension_numbers<[1], [0], [0], [1], [0, 0, 1, 1], [], []>} : vector<128x32xbf16>, vector<32x128xbf16>, vector<128x128xf32> -> vector<128x128xf32>
    %c0_3 = arith.constant 0 : index
    %c0_4 = arith.constant 0 : index
    %6 = vector.load %arg3[%c0_3, %c0_4] : memref<1x128xf32, #tpu.memory_space<vmem>>, vector<1x128xf32>
    %7 = vector.broadcast %6 : vector<1x128xf32> to vector<128x128xf32>
    %8 = arith.addf %5, %7 : vector<128x128xf32>
    %9 = math.tanh %8 : vector<128x128xf32>
    %10 = arith.truncf %9 : vector<128x128xf32> to vector<128x128xbf16>
    %c0_5 = arith.constant 0 : index
    %c0_6 = arith.constant 0 : index
    %11 = vector.load %arg4[%c0_5, %c0_6] : memref<128x128xbf16, #tpu.memory_space<vmem>>, vector<128x128xbf16>
    %cst_7 = arith.constant dense<0.000000e+00> : vector<128x128xf32>
    %12 = tpu.matmul %10, %11, %cst_7 {dimension_numbers = #tpu.dot_dimension_numbers<[1], [0], [0], [1], [0, 0, 1, 1], [], []>} : vector<128x128xbf16>, vector<128x128xbf16>, vector<128x128xf32> -> vector<128x128xf32>
    %c0_8 = arith.constant 0 : index
    %c0_9 = arith.constant 0 : index
    %13 = vector.load %arg5[%c0_8, %c0_9] : memref<1x128xf32, #tpu.memory_space<vmem>>, vector<1x128xf32>
    %14 = vector.broadcast %13 : vector<1x128xf32> to vector<128x128xf32>
    %15 = arith.addf %12, %14 : vector<128x128xf32>
    %16 = math.tanh %15 : vector<128x128xf32>
    %17 = arith.addf %16, %9 : vector<128x128xf32>
    %c0_10 = arith.constant 0 : index
    %c0_11 = arith.constant 0 : index
    %18 = vector.load %arg6[%c0_10, %c0_11] : memref<1x128xf32, #tpu.memory_space<vmem>>, vector<1x128xf32>
    %19 = vector.broadcast %18 : vector<1x128xf32> to vector<128x128xf32>
    %20 = arith.mulf %17, %19 : vector<128x128xf32>
    %cst_12 = arith.constant dense<0.000000e+00> : vector<128xf32>
    %21 = vector.multi_reduction <add>, %20, %cst_12 [1] : vector<128x128xf32> to vector<128xf32>
    %22 = vector.shape_cast %21 : vector<128xf32> to vector<128x1xf32>
    %c0_13 = arith.constant 0 : index
    %c0_14 = arith.constant 0 : index
    %23 = vector.load %arg7[%c0_13, %c0_14] : memref<1x1xf32, #tpu.memory_space<vmem>>, vector<1x1xf32>
    %24 = vector.broadcast %23 : vector<1x1xf32> to vector<128x1xf32>
    %25 = arith.addf %22, %24 : vector<128x1xf32>
    %cst_15 = arith.constant 0.000000e+00 : f32
    %26 = vector.broadcast %cst_15 : f32 to vector<128x1xf32>
    %27 = arith.subf %26, %25 : vector<128x1xf32>
    %28 = math.exp %27 : vector<128x1xf32>
    %cst_16 = arith.constant 1.000000e+00 : f32
    %29 = vector.broadcast %cst_16 : f32 to vector<128x1xf32>
    %30 = arith.addf %29, %28 : vector<128x1xf32>
    %31 = tpu.reciprocal %30 {approx = true} : vector<128x1xf32> -> vector<128x1xf32>
    %32 = arith.subf %1, %2 : vector<128x1xf32>
    %33 = arith.mulf %32, %31 : vector<128x1xf32>
    %34 = arith.addf %2, %33 : vector<128x1xf32>
    %c0_17 = arith.constant 0 : index
    %c0_18 = arith.constant 0 : index
    %35 = vector.load %arg8[%c0_17, %c0_18] : memref<128x1xf32, #tpu.memory_space<vmem>>, vector<128x1xf32>
    tpu.vector_store %arg8[%c0_17, %c0_18], %34 {strides = array<i32>} : memref<128x1xf32, #tpu.memory_space<vmem>>, vector<128x1xf32>,
    return
  }
  func.func @transform_0(%arg0: i32) -> (i32, i32) {
    %c0_i32 = arith.constant 0 : i32
    %c0_i32_0 = arith.constant 0 : i32
    return %arg0, %c0_i32 : i32, i32
  }
  func.func @transform_1(%arg0: i32) -> (i32, i32) {
    %c0_i32 = arith.constant 0 : i32
    %c0_i32_0 = arith.constant 0 : i32
    %c0_i32_1 = arith.constant 0 : i32
    return %c0_i32, %c0_i32_0 : i32, i32
  }
  func.func @transform_2(%arg0: i32) -> (i32, i32) {
    %c0_i32 = arith.constant 0 : i32
    %c0_i32_0 = arith.constant 0 : i32
    %c0_i32_1 = arith.constant 0 : i32
    return %c0_i32, %c0_i32_0 : i32, i32
  }
  func.func @transform_3(%arg0: i32) -> (i32, i32) {
    %c0_i32 = arith.constant 0 : i32
    %c0_i32_0 = arith.constant 0 : i32
    %c0_i32_1 = arith.constant 0 : i32
    return %c0_i32, %c0_i32_0 : i32, i32
  }
  func.func @transform_4(%arg0: i32) -> (i32, i32) {
    %c0_i32 = arith.constant 0 : i32
    %c0_i32_0 = arith.constant 0 : i32
    %c0_i32_1 = arith.constant 0 : i32
    return %c0_i32, %c0_i32_0 : i32, i32
  }
  func.func @transform_5(%arg0: i32) -> (i32, i32) {
    %c0_i32 = arith.constant 0 : i32
    %c0_i32_0 = arith.constant 0 : i32
    %c0_i32_1 = arith.constant 0 : i32
    return %c0_i32, %c0_i32_0 : i32, i32
  }
  func.func @transform_6(%arg0: i32) -> (i32, i32) {
    %c0_i32 = arith.constant 0 : i32
    %c0_i32_0 = arith.constant 0 : i32
    %c0_i32_1 = arith.constant 0 : i32
    return %c0_i32, %c0_i32_0 : i32, i32
  }
  func.func @transform_7(%arg0: i32) -> (i32, i32) {
    %c0_i32 = arith.constant 0 : i32
    %c0_i32_0 = arith.constant 0 : i32
    return %arg0, %c0_i32 : i32, i32
  }
}

</mosaic_0001>

<llo_original>
// kernel: tpu_custom_call.1
$region0: #{tpu_custom_call.1}
  #allocation0 [shape = 'u32[]', space=smem, size = 0x4, offset = 0x4, fixed_abs, tag = 'smem constant byte address 0x4 - core index']
  #allocation1 [shape = 'u32[144,128]{1,0:T(1,128)}', space=vmem, size = 0x12000, scoped, tag = 'internal scratch']
  #allocation2 [shape = 'f32[1,1]{1,0:T(1,128)S(1)}', space=vmem, size = 0x200, scoped, tag = 'scoped memory for tpu_custom_call.1']
  %s0 = inlined_call_operand.vmem [shape: f32[512,32], index: 0, kind: input, shape index: {}]
  %s1 = inlined_call_operand.vmem [shape: bf16[32,128], index: 1, kind: input, shape index: {}]
  %s2 = inlined_call_operand.vmem [shape: f32[1,128], index: 2, kind: input, shape index: {}]
  %s3 = inlined_call_operand.vmem [shape: bf16[128,128], index: 3, kind: input, shape index: {}]
  %s4 = inlined_call_operand.vmem [shape: f32[1,128], index: 4, kind: input, shape index: {}]
  %s5 = inlined_call_operand.vmem [shape: f32[1,128], index: 5, kind: input, shape index: {}]
  %s6 = inlined_call_operand.<no memory space> [shape: f32[1,1], index: 6, kind: input, shape index: {}]
  %s7 = inlined_call_operand.vmem [shape: f32[512,1], index: 7, kind: output, shape index: {}]
  %s8 = sld [smem:[#allocation0]]
  $region61: #{tpu_custom_call.1} parent=0
    _
  %s10 = ssub.s32 1, %s8
  %s11 = scalar_select 0, %s10, %s8
  %v12 = vstv %s6
  %13 = vst [vmem:[#allocation2] sm:$0x1] %v12
  loop: start=0, step=1, limit=6
  $region2: #{tpu_custom_call.1} parent=0 // loop_pre_header
    _
  $region3: #{tpu_custom_call.1} parent=0 // loop_header
    %s15 = sphi 0, %s19
    %p16 = scmp.ge.s32.totalorder %s15, 6
    %s25 = sphi 0, %s27
    %s28 = sphi 0, %s25
    %s29 = sphi 0, %s28
    %s45 = sphi 0, %s29
    %s49 = sphi 0, %s49
    %s51 = sphi 0, %s49
    %s52 = sphi 0, %s51
    %s66 = sphi 0, %s52
    %s70 = sphi 0, %s70
    %s72 = sphi 0, %s70
    %s73 = sphi 0, %s72
    %s87 = sphi 0, %s73
    %s91 = sphi 0, %s91
    %s93 = sphi 0, %s91
    %s94 = sphi 0, %s93
    %s108 = sphi 0, %s94
    %s112 = sphi 0, %s112
    %s114 = sphi 0, %s112
    %s115 = sphi 0, %s114
    %s129 = sphi 0, %s115
    %s133 = sphi 0, %s133
    %s135 = sphi 0, %s133
    %s136 = sphi 0, %s135
    %s150 = sphi 0, %s136
    %s154 = sphi 0, %s154
    %s156 = sphi 0, %s154
    %s157 = sphi 0, %s156
    %s171 = sphi 0, %s157
    %s177 = sphi 0, %s179
    %s180 = sphi 0, %s177
    %s181 = sphi 0, %s180
    %s197 = sphi 0, %s181
  $region4: #{tpu_custom_call.1} parent=0 // loop_header_branch
    %18 = sbr.rel (%p16) target = $region8
  $region5: #{tpu_custom_call.1} parent=0 // loop_body
    %s20 = ssub.s32 %s15, 1
    %s21 = ssub.s32 %s15, 2
    %s22 = sadd.s32 %s15, 1
    %s23 = ssub.s32 %s15, %s22
    %p24 = scmp.eq.s32.totalorder %s23, 0
    %s26 = sadd.s32 %s25, 1
    %s27 = scalar_select %p24, %s25, %s26
    %p30 = pneg %p24
    %p31 = scmp.eq.s32.totalorder %s15, 3
    %p32 = por %p30, %p31
    %p33 = scmp.ne.s32.totalorder %s25, %s28
    %p34 = scmp.eq.s32.totalorder %s15, 0
    %p35 = por %p33, %p34
    %p36 = scmp.ne.s32.totalorder %s25, %s28
    %p37 = scmp.eq.s32.totalorder %s20, 3
    %p38 = por %p36, %p37
    %p39 = scmp.ne.s32.totalorder %s28, %s29
    %p40 = scmp.eq.s32.totalorder %s20, 0
    %p41 = por %p39, %p40
    %p42 = scmp.ne.s32.totalorder %s28, %s29
    %p43 = scmp.eq.s32.totalorder %s21, 3
    %p44 = por %p42, %p43
    %p46 = scmp.ne.s32.totalorder %s29, %s45
    %p47 = scmp.eq.s32.totalorder %s21, 0
    %p48 = por %p46, %p47
    %s50 = sadd.s32 %s49, 1
    %p53 = scmp.eq.s32.totalorder %s15, 3
    %p54 = scmp.ne.s32.totalorder %s49, %s51
    %p55 = scmp.eq.s32.totalorder %s15, 0
    %p56 = por %p54, %p55
    %p57 = scmp.ne.s32.totalorder %s49, %s51
    %p58 = scmp.eq.s32.totalorder %s20, 3
    %p59 = por %p57, %p58
    %p60 = scmp.ne.s32.totalorder %s51, %s52
    %p61 = scmp.eq.s32.totalorder %s20, 0
    %p62 = por %p60, %p61
    %p63 = scmp.ne.s32.totalorder %s51, %s52
    %p64 = scmp.eq.s32.totalorder %s21, 3
    %p65 = por %p63, %p64
    %p67 = scmp.ne.s32.totalorder %s52, %s66
    %p68 = scmp.eq.s32.totalorder %s21, 0
    %p69 = por %p67, %p68
    %s71 = sadd.s32 %s70, 1
    %p74 = scmp.eq.s32.totalorder %s15, 3
    %p75 = scmp.ne.s32.totalorder %s70, %s72
    %p76 = scmp.eq.s32.totalorder %s15, 0
    %p77 = por %p75, %p76
    %p78 = scmp.ne.s32.totalorder %s70, %s72
    %p79 = scmp.eq.s32.totalorder %s20, 3
    %p80 = por %p78, %p79
    %p81 = scmp.ne.s32.totalorder %s72, %s73
    %p82 = scmp.eq.s32.totalorder %s20, 0
    %p83 = por %p81, %p82
    %p84 = scmp.ne.s32.totalorder %s72, %s73
    %p85 = scmp.eq.s32.totalorder %s21, 3
    %p86 = por %p84, %p85
    %p88 = scmp.ne.s32.totalorder %s73, %s87
    %p89 = scmp.eq.s32.totalorder %s21, 0
    %p90 = por %p88, %p89
    %s92 = sadd.s32 %s91, 1
    %p95 = scmp.eq.s32.totalorder %s15, 3
    %p96 = scmp.ne.s32.totalorder %s91, %s93
    %p97 = scmp.eq.s32.totalorder %s15, 0
    %p98 = por %p96, %p97
    %p99 = scmp.ne.s32.totalorder %s91, %s93
    %p100 = scmp.eq.s32.totalorder %s20, 3
    %p101 = por %p99, %p100
    %p102 = scmp.ne.s32.totalorder %s93, %s94
    %p103 = scmp.eq.s32.totalorder %s20, 0
    %p104 = por %p102, %p103
    %p105 = scmp.ne.s32.totalorder %s93, %s94
    %p106 = scmp.eq.s32.totalorder %s21, 3
    %p107 = por %p105, %p106
    %p109 = scmp.ne.s32.totalorder %s94, %s108
    %p110 = scmp.eq.s32.totalorder %s21, 0
    %p111 = por %p109, %p110
    %s113 = sadd.s32 %s112, 1
    %p116 = scmp.eq.s32.totalorder %s15, 3
    %p117 = scmp.ne.s32.totalorder %s112, %s114
    %p118 = scmp.eq.s32.totalorder %s15, 0
    %p119 = por %p117, %p118
    %p120 = scmp.ne.s32.totalorder %s112, %s114
    %p121 = scmp.eq.s32.totalorder %s20, 3
    %p122 = por %p120, %p121
    %p123 = scmp.ne.s32.totalorder %s114, %s115
    %p124 = scmp.eq.s32.totalorder %s20, 0
    %p125 = por %p123, %p124
    %p126 = scmp.ne.s32.totalorder %s114, %s115
    %p127 = scmp.eq.s32.totalorder %s21, 3
    %p128 = por %p126, %p127
    %p130 = scmp.ne.s32.totalorder %s115, %s129
    %p131 = scmp.eq.s32.totalorder %s21, 0
    %p132 = por %p130, %p131
    %s134 = sadd.s32 %s133, 1
    %p137 = scmp.eq.s32.totalorder %s15, 3
    %p138 = scmp.ne.s32.totalorder %s133, %s135
    %p139 = scmp.eq.s32.totalorder %s15, 0
    %p140 = por %p138, %p139
    %p141 = scmp.ne.s32.totalorder %s133, %s135
    %p142 = scmp.eq.s32.totalorder %s20, 3
    %p143 = por %p141, %p142
    %p144 = scmp.ne.s32.totalorder %s135, %s136
    %p145 = scmp.eq.s32.totalorder %s20, 0
    %p146 = por %p144, %p145
    %p147 = scmp.ne.s32.totalorder %s135, %s136
    %p148 = scmp.eq.s32.totalorder %s21, 3
    %p149 = por %p147, %p148
    %p151 = scmp.ne.s32.totalorder %s136, %s150
    %p152 = scmp.eq.s32.totalorder %s21, 0
    %p153 = por %p151, %p152
    %s155 = sadd.s32 %s154, 1
    %p158 = scmp.eq.s32.totalorder %s15, 3
    %p159 = scmp.ne.s32.totalorder %s154, %s156
    %p160 = scmp.eq.s32.totalorder %s15, 0
    %p161 = por %p159, %p160
    %p162 = scmp.ne.s32.totalorder %s154, %s156
    %p163 = scmp.eq.s32.totalorder %s20, 3
    %p164 = por %p162, %p163
    %p165 = scmp.ne.s32.totalorder %s156, %s157
    %p166 = scmp.eq.s32.totalorder %s20, 0
    %p167 = por %p165, %p166
    %p168 = scmp.ne.s32.totalorder %s156, %s157
    %p169 = scmp.eq.s32.totalorder %s21, 3
    %p170 = por %p168, %p169
    %p172 = scmp.ne.s32.totalorder %s157, %s171
    %p173 = scmp.eq.s32.totalorder %s21, 0
    %p174 = por %p172, %p173
    %s175 = ssub.s32 %s15, %s22
    %p176 = scmp.eq.s32.totalorder %s175, 0
    %s178 = sadd.s32 %s177, 1
    %s179 = scalar_select %p176, %s177, %s178
    %p182 = pneg %p176
    %p183 = scmp.eq.s32.totalorder %s15, 3
    %p184 = por %p182, %p183
    %p185 = scmp.ne.s32.totalorder %s177, %s180
    %p186 = scmp.eq.s32.totalorder %s15, 0
    %p187 = por %p185, %p186
    %p188 = scmp.ne.s32.totalorder %s177, %s180
    %p189 = scmp.eq.s32.totalorder %s20, 3
    %p190 = por %p188, %p189
    %p191 = scmp.ne.s32.totalorder %s180, %s181
    %p192 = scmp.eq.s32.totalorder %s20, 0
    %p193 = por %p191, %p192
    %p194 = scmp.ne.s32.totalorder %s180, %s181
    %p195 = scmp.eq.s32.totalorder %s21, 3
    %p196 = por %p194, %p195
    %p198 = scmp.ne.s32.totalorder %s181, %s197
    %p199 = scmp.eq.s32.totalorder %s21, 0
    %p200 = por %p198, %p199
    %p201 = scmp.le.s32.totalorder 1, %s15
    %p202 = scmp.lt.s32.totalorder %s15, 5
    %p203 = pnand %p201, %p202
    %p204 = pneg %p203
    // Predicated region
    $region9: #{tpu_custom_call.1} parent=5 // pred_check
      _
    $region10: #{tpu_custom_call.1} parent=5 // pred_check_branch
      %206 = sbr.rel (%p203) target = $region12
    $region11: #{tpu_custom_call.1} parent=5 // pred_region
      %s207 = ssub.s32 %s15, 1
      // Predicated region
      $region13: #{tpu_custom_call.1} parent=11 // pred_check
        %p208 = pneg %p62
      $region14: #{tpu_custom_call.1} parent=11 // pred_check_branch
        %210 = sbr.rel (%p208) target = $region16
      $region15: #{tpu_custom_call.1} parent=11 // pred_region
        _
      $region16: #{tpu_custom_call.1} parent=11 // pred_fallthru
        _
      // Predicated region
      $region17: #{tpu_custom_call.1} parent=11 // pred_check
        %p211 = pneg %p83
      $region18: #{tpu_custom_call.1} parent=11 // pred_check_branch
        %213 = sbr.rel (%p211) target = $region20
      $region19: #{tpu_custom_call.1} parent=11 // pred_region
        _
      $region20: #{tpu_custom_call.1} parent=11 // pred_fallthru
        _
      // Predicated region
      $region21: #{tpu_custom_call.1} parent=11 // pred_check
        %p214 = pneg %p104
      $region22: #{tpu_custom_call.1} parent=11 // pred_check_branch
        %216 = sbr.rel (%p214) target = $region24
      $region23: #{tpu_custom_call.1} parent=11 // pred_region
        _
      $region24: #{tpu_custom_call.1} parent=11 // pred_fallthru
        _
      // Predicated region
      $region25: #{tpu_custom_call.1} parent=11 // pred_check
        %p217 = pneg %p125
      $region26: #{tpu_custom_call.1} parent=11 // pred_check_branch
        %219 = sbr.rel (%p217) target = $region28
      $region27: #{tpu_custom_call.1} parent=11 // pred_region
        _
      $region28: #{tpu_custom_call.1} parent=11 // pred_fallthru
        _
      // Predicated region
      $region29: #{tpu_custom_call.1} parent=11 // pred_check
        %p220 = pneg %p146
      $region30: #{tpu_custom_call.1} parent=11 // pred_check_branch
        %222 = sbr.rel (%p220) target = $region32
      $region31: #{tpu_custom_call.1} parent=11 // pred_region
        _
      $region32: #{tpu_custom_call.1} parent=11 // pred_fallthru
        _
      // Predicated region
      $region33: #{tpu_custom_call.1} parent=11 // pred_check
        %p223 = pneg %p167
      $region34: #{tpu_custom_call.1} parent=11 // pred_check_branch
        %225 = sbr.rel (%p223) target = $region36
      $region35: #{tpu_custom_call.1} parent=11 // pred_region
        _
      $region36: #{tpu_custom_call.1} parent=11 // pred_fallthru
        _
    $region12: #{tpu_custom_call.1} parent=5 // pred_fallthru
      _
    %p226 = scmp.lt.s32.totalorder %s15, 4
    // Predicated region
    $region37: #{tpu_custom_call.1} parent=5 // pred_check
      %p227 = pneg %p226
    $region38: #{tpu_custom_call.1} parent=5 // pred_check_branch
      %229 = sbr.rel (%p227) target = $region40
    $region39: #{tpu_custom_call.1} parent=5 // pred_region
      // Predicated region
      $region41: #{tpu_custom_call.1} parent=39 // pred_check
        %p230 = pneg %p35
      $region42: #{tpu_custom_call.1} parent=39 // pred_check_branch
        %232 = sbr.rel (%p230) target = $region44
      $region43: #{tpu_custom_call.1} parent=39 // pred_region
        %s233 = smul.u32 16, %s15
        %p234 = scmp.lt.s32.totalorder %s233, 63
        %s235 = scalar_select %p234, %s233, 63
        %s236 = smul.addr %s235, 8
        %s237 = scalar_lea.vmem %s0, %s236
        %s238 = smul.u32 16, %s15
      $region44: #{tpu_custom_call.1} parent=39 // pred_fallthru
        _
    $region40: #{tpu_custom_call.1} parent=5 // pred_fallthru
      _
    %p239 = scmp.le.s32.totalorder 1, %s15
    %p240 = scmp.lt.s32.totalorder %s15, 5
    %p241 = pnand %p239, %p240
    %p242 = pneg %p241
    // Predicated region
    $region45: #{tpu_custom_call.1} parent=5 // pred_check
      _
    $region46: #{tpu_custom_call.1} parent=5 // pred_check_branch
      %244 = sbr.rel (%p241) target = $region48
    $region47: #{tpu_custom_call.1} parent=5 // pred_region
      %s245 = ssub.s32 %s15, 1
      %s246 = smul.u32 16, %s20
      %p247 = scmp.lt.s32.totalorder %s246, 63
      %s248 = scalar_select %p247, %s246, 63
      %s249 = smul.addr %s248, 8
      %s250 = scalar_lea.vmem %s0, %s249
      %p251 = pneg %p41
      %p252 = pneg %p38
      %p253 = pneg %p62
      %p254 = pneg %p59
      %p255 = pneg %p83
      %p256 = pneg %p80
      %p257 = pneg %p104
      %p258 = pneg %p101
      %p259 = pneg %p125
      %p260 = pneg %p122
      %p261 = pneg %p146
      %p262 = pneg %p143
      %p263 = pneg %p167
      %p264 = pneg %p164
      %p265 = pneg %p193
      %p266 = pneg %p190
      %s267 = smul.u32 16, %s20
      %p268 = scmp.lt.s32.totalorder %s267, 63
      %s269 = scalar_select %p268, %s267, 63
      %s270 = smul.addr %s269, 8
      %s271 = scalar_lea.vmem %s7, %s270
      %s272 = smul.u32 16, %s20
      %p273 = scmp.lt.s32.totalorder %s272, 63
      %s274 = scalar_select %p273, %s272, 63
      %s275 = smul.addr %s274, 8
      %s276 = scalar_lea.vmem %s0, %s275
      %s277 = smul.u32 16, %s20
      %s278 = smul.u32 16, %s20
      %p279 = scmp.lt.s32.totalorder %s278, 63
      %s280 = scalar_select %p279, %s278, 63
      %s281 = smul.addr %s280, 8
      %s282 = scalar_lea.vmem %s7, %s281
      %s283 = smul.u32 16, %s20
      %v285 = vld [vmem:[%s276] sm:$0xff]
      %v286 = vld [vmem:[%s276 + $0x8] sm:$0xff]
      %v287 = vld [vmem:[%s276 + $0x10] sm:$0xff]
      %v288 = vld [vmem:[%s276 + $0x18] sm:$0xff]
      %v289 = vld [vmem:[%s276 + $0x20] sm:$0xff]
      %v290 = vld [vmem:[%s276 + $0x28] sm:$0xff]
      %v291 = vld [vmem:[%s276 + $0x30] sm:$0xff]
      %v292 = vld [vmem:[%s276 + $0x38] sm:$0xff]
      %v293 = vld [vmem:[%s276 + $0x40] sm:$0xff]
      %v294 = vld [vmem:[%s276 + $0x48] sm:$0xff]
      %v295 = vld [vmem:[%s276 + $0x50] sm:$0xff]
      %v296 = vld [vmem:[%s276 + $0x58] sm:$0xff]
      %v297 = vld [vmem:[%s276 + $0x60] sm:$0xff]
      %v298 = vld [vmem:[%s276 + $0x68] sm:$0xff]
      %v299 = vld [vmem:[%s276 + $0x70] sm:$0xff]
      %v300 = vld [vmem:[%s276 + $0x78] sm:$0xff]
      %v301 = vpack.c.bf16 %v286, %v285
      %v302 = vpack.c.bf16 %v288, %v287
      %v303 = vpack.c.bf16 %v290, %v289
      %v304 = vpack.c.bf16 %v292, %v291
      %v305 = vpack.c.bf16 %v294, %v293
      %v306 = vpack.c.bf16 %v296, %v295
      %v307 = vpack.c.bf16 %v298, %v297
      %v308 = vpack.c.bf16 %v300, %v299
      %v309 = vld [vmem:[%s1] sm:$0xf]
      %v310 = vld [vmem:[%s1 + $0x4] sm:$0xf]
      %v311 = vld [vmem:[%s1 + $0x8] sm:$0xf]
      %v312 = vld [vmem:[%s1 + $0xc] sm:$0xf]
      %v313 = vld [vmem:[%s2] sm:$0x1]
      %v315 = vlaneseq
      %v316 = vshrl.u32 %v315, 7
      %v317 = vsub.s32 0, %v316
      %v318 = vrot.slane %v313, %v317
      %v324 = vunpack.c.l.b16 %v309
      %v325 = vunpack.c.l.b16 %v310
      %v326 = vunpack.c.l.b16 %v311
      %v327 = vunpack.c.l.b16 %v312
      %v328 = vpack.c.b16 %v325, %v324
      %v329 = vpack.c.b16 %v327, %v326
      %vm332 = vcmask 261120
      %v334 = vsel %vm332, %v301, 0
      %v337 = vsel %vm332, %v302, 0
      %v340 = vsel %vm332, %v303, 0
      %v343 = vsel %vm332, %v304, 0
      %v346 = vsel %vm332, %v305, 0
      %v349 = vsel %vm332, %v306, 0
      %v352 = vsel %vm332, %v307, 0
      %v355 = vsel %vm332, %v308, 0
      %357 = vmatprep.subr.bf16.mxu0 0
      %358 = vmatpush1.bf16.msra.mxu0 %v328
      %359 = vmatprep.subr.bf16.mxu0 0
      %360 = vmatpush1.bf16.msra.mxu0 %v329
      %361 = vmatprep.subr.bf16.mxu0 0
      %362 = vmatpush1.bf16.msra.mxu0 0
      %363 = vmatprep.subr.bf16.mxu0 0
      %364 = vmatpush1.bf16.msra.mxu0 0
      %365 = vmatprep.subr.bf16.mxu0 0
      %366 = vmatpush1.bf16.msra.mxu0 0
      %367 = vmatprep.subr.bf16.mxu0 0
      %368 = vmatpush1.bf16.msra.mxu0 0
      %369 = vmatprep.subr.bf16.mxu0 0
      %370 = vmatpush1.bf16.msra.mxu0 0
      %371 = vmatprep.subr.bf16.mxu0 0
      %372 = vmatpush1.bf16.msra.mxu0 0
      %373 = vmatprep.subr.bf16.mxu0 0
      %374 = vmatpush1.bf16.msra.mxu0 0
      %375 = vmatprep.subr.bf16.mxu0 0
      %376 = vmatpush1.bf16.msra.mxu0 0
      %377 = vmatprep.subr.bf16.mxu0 0
      %378 = vmatpush1.bf16.msra.mxu0 0
      %379 = vmatprep.subr.bf16.mxu0 0
      %380 = vmatpush1.bf16.msra.mxu0 0
      %381 = vmatprep.subr.bf16.mxu0 0
      %382 = vmatpush1.bf16.msra.mxu0 0
      %383 = vmatprep.subr.bf16.mxu0 0
      %384 = vmatpush1.bf16.msra.mxu0 0
      %385 = vmatprep.subr.bf16.mxu0 0
      %386 = vmatpush1.bf16.msra.mxu0 0
      %387 = vmatprep.subr.bf16.mxu0 0
      %388 = vmatpush1.bf16.msra.mxu0 0
      %389 = vmatprep.mubr.bf16.mxu0 0
      %390 = vmatmul.mubr.bf16.gmra.mrb[0].mxu0 %v334
      %v391 = vpop.f32.mrb[0].mxu0
      %v392 = vadd.f32 %v318, %v391
      %v393 = vpop.f32.mrb[0].mxu0
      %v394 = vpop.f32.mrb[0].mxu0
      %v395 = vadd.f32 %v318, %v394
      %v396 = vpop.f32.mrb[0].mxu0
      %397 = vmatprep.mubr.bf16.mxu0 0
      %398 = vmatmul.mubr.bf16.gmra.mrb[0].mxu0 %v337
      %v399 = vpop.f32.mrb[0].mxu0
      %v400 = vadd.f32 %v318, %v399
      %v401 = vpop.f32.mrb[0].mxu0
      %v402 = vpop.f32.mrb[0].mxu0
      %v403 = vadd.f32 %v318, %v402
      %v404 = vpop.f32.mrb[0].mxu0
      %405 = vmatprep.mubr.bf16.mxu0 0
      %406 = vmatmul.mubr.bf16.gmra.mrb[0].mxu0 %v340
      %v407 = vpop.f32.mrb[0].mxu0
      %v408 = vadd.f32 %v318, %v407
      %v409 = vpop.f32.mrb[0].mxu0
      %v410 = vpop.f32.mrb[0].mxu0
      %v411 = vadd.f32 %v318, %v410
      %v412 = vpop.f32.mrb[0].mxu0
      %413 = vmatprep.mubr.bf16.mxu0 0
      %414 = vmatmul.mubr.bf16.gmra.mrb[0].mxu0 %v343
      %v415 = vpop.f32.mrb[0].mxu0
      %v416 = vadd.f32 %v318, %v415
      %v417 = vpop.f32.mrb[0].mxu0
      %v418 = vpop.f32.mrb[0].mxu0
      %v419 = vadd.f32 %v318, %v418
      %v420 = vpop.f32.mrb[0].mxu0
      %421 = vmatprep.mubr.bf16.mxu0 0
      %422 = vmatmul.mubr.bf16.gmra.mrb[0].mxu0 %v346
      %v423 = vpop.f32.mrb[0].mxu0
      %v424 = vadd.f32 %v318, %v423
      %v425 = vpop.f32.mrb[0].mxu0
      %v426 = vpop.f32.mrb[0].mxu0
      %v427 = vadd.f32 %v318, %v426
      %v428 = vpop.f32.mrb[0].mxu0
      %429 = vmatprep.mubr.bf16.mxu0 0
      %430 = vmatmul.mubr.bf16.gmra.mrb[0].mxu0 %v349
      %v431 = vpop.f32.mrb[0].mxu0
      %v432 = vadd.f32 %v318, %v431
      %v433 = vpop.f32.mrb[0].mxu0
      %v434 = vpop.f32.mrb[0].mxu0
      %v435 = vadd.f32 %v318, %v434
      %v436 = vpop.f32.mrb[0].mxu0
      %437 = vmatprep.mubr.bf16.mxu0 0
      %438 = vmatmul.mubr.bf16.gmra.mrb[0].mxu0 %v352
      %v439 = vpop.f32.mrb[0].mxu0
      %v440 = vadd.f32 %v318, %v439
      %v441 = vpop.f32.mrb[0].mxu0
      %v442 = vpop.f32.mrb[0].mxu0
      %v443 = vadd.f32 %v318, %v442
      %v444 = vpop.f32.mrb[0].mxu0
      %445 = vmatprep.mubr.bf16.mxu0 0
      %446 = vmatmul.mubr.bf16.gmra.mrb[0].mxu0 %v355
      %v447 = vpop.f32.mrb[0].mxu0
      %v448 = vadd.f32 %v318, %v447
      %v449 = vpop.f32.mrb[0].mxu0
      %v450 = vpop.f32.mrb[0].mxu0
      %v451 = vadd.f32 %v318, %v450
      %v452 = vpop.f32.mrb[0].mxu0
      %453 = vdwg.mxu0
      %v454 = vtanh.pop %v392
      %v455 = vtanh.pop %v395
      %v456 = vtanh.pop %v400
      %v457 = vtanh.pop %v403
      %v458 = vtanh.pop %v408
      %v459 = vtanh.pop %v411
      %v460 = vtanh.pop %v416
      %v461 = vtanh.pop %v419
      %v462 = vtanh.pop %v424
      %v463 = vtanh.pop %v427
      %v464 = vtanh.pop %v432
      %v465 = vtanh.pop %v435
      %v466 = vtanh.pop %v440
      %v467 = vtanh.pop %v443
      %v468 = vtanh.pop %v448
      %v469 = vtanh.pop %v451
      %v470 = vpack.c.bf16 %v455, %v454
      %v471 = vpack.c.bf16 %v457, %v456
      %v472 = vpack.c.bf16 %v459, %v458
      %v473 = vpack.c.bf16 %v461, %v460
      %v474 = vpack.c.bf16 %v463, %v462
      %v475 = vpack.c.bf16 %v465, %v464
      %v476 = vpack.c.bf16 %v467, %v466
      %v477 = vpack.c.bf16 %v469, %v468
      %v478 = vld [vmem:[%s3] sm:$0xf]
      %v479 = vld [vmem:[%s3 + $0x4] sm:$0xf]
      %v480 = vld [vmem:[%s3 + $0x8] sm:$0xf]
      %v481 = vld [vmem:[%s3 + $0xc] sm:$0xf]
      %v482 = vld [vmem:[%s3 + $0x10] sm:$0xf]
      %v483 = vld [vmem:[%s3 + $0x14] sm:$0xf]
      %v484 = vld [vmem:[%s3 + $0x18] sm:$0xf]
      %v485 = vld [vmem:[%s3 + $0x1c] sm:$0xf]
      %v486 = vld [vmem:[%s3 + $0x20] sm:$0xf]
      %v487 = vld [vmem:[%s3 + $0x24] sm:$0xf]
      %v488 = vld [vmem:[%s3 + $0x28] sm:$0xf]
      %v489 = vld [vmem:[%s3 + $0x2c] sm:$0xf]
      %v490 = vld [vmem:[%s3 + $0x30] sm:$0xf]
      %v491 = vld [vmem:[%s3 + $0x34] sm:$0xf]
      %v492 = vld [vmem:[%s3 + $0x38] sm:$0xf]
      %v493 = vld [vmem:[%s3 + $0x3c] sm:$0xf]
      %v494 = vld [vmem:[%s4] sm:$0x1]
      %v496 = vlaneseq
      %v497 = vshrl.u32 %v496, 7
      %v498 = vsub.s32 0, %v497
      %v499 = vrot.slane %v494, %v498
      %v517 = vunpack.c.l.b16 %v478
      %v518 = vunpack.c.l.b16 %v479
      %v519 = vunpack.c.l.b16 %v480
      %v520 = vunpack.c.l.b16 %v481
      %v521 = vunpack.c.l.b16 %v482
      %v522 = vunpack.c.l.b16 %v483
      %v523 = vunpack.c.l.b16 %v484
      %v524 = vunpack.c.l.b16 %v485
      %v525 = vunpack.c.l.b16 %v486
      %v526 = vunpack.c.l.b16 %v487
      %v527 = vunpack.c.l.b16 %v488
      %v528 = vunpack.c.l.b16 %v489
      %v529 = vunpack.c.l.b16 %v490
      %v530 = vunpack.c.l.b16 %v491
      %v531 = vunpack.c.l.b16 %v492
      %v532 = vunpack.c.l.b16 %v493
      %v533 = vpack.c.b16 %v518, %v517
      %v534 = vpack.c.b16 %v520, %v519
      %v535 = vpack.c.b16 %v522, %v521
      %v536 = vpack.c.b16 %v524, %v523
      %v537 = vpack.c.b16 %v526, %v525
      %v538 = vpack.c.b16 %v528, %v527
      %v539 = vpack.c.b16 %v530, %v529
      %v540 = vpack.c.b16 %v532, %v531
      %549 = vmatprep.subr.bf16.mxu0 0
      %550 = vmatpush1.bf16.msra.mxu0 %v533
      %551 = vmatprep.subr.bf16.mxu0 0
      %552 = vmatpush1.bf16.msra.mxu0 %v534
      %553 = vmatprep.subr.bf16.mxu0 0
      %554 = vmatpush1.bf16.msra.mxu0 %v535
      %555 = vmatprep.subr.bf16.mxu0 0
      %556 = vmatpush1.bf16.msra.mxu0 %v536
      %557 = vmatprep.subr.bf16.mxu0 0
      %558 = vmatpush1.bf16.msra.mxu0 %v537
      %559 = vmatprep.subr.bf16.mxu0 0
      %560 = vmatpush1.bf16.msra.mxu0 %v538
      %561 = vmatprep.subr.bf16.mxu0 0
      %562 = vmatpush1.bf16.msra.mxu0 %v539
      %563 = vmatprep.subr.bf16.mxu0 0
      %564 = vmatpush1.bf16.msra.mxu0 %v540
      %565 = vmatprep.subr.bf16.mxu0 0
      %566 = vmatpush1.bf16.msra.mxu0 0
      %567 = vmatprep.subr.bf16.mxu0 0
      %568 = vmatpush1.bf16.msra.mxu0 0
      %569 = vmatprep.subr.bf16.mxu0 0
      %570 = vmatpush1.bf16.msra.mxu0 0
      %571 = vmatprep.subr.bf16.mxu0 0
      %572 = vmatpush1.bf16.msra.mxu0 0
      %573 = vmatprep.subr.bf16.mxu0 0
      %574 = vmatpush1.bf16.msra.mxu0 0
      %575 = vmatprep.subr.bf16.mxu0 0
      %576 = vmatpush1.bf16.msra.mxu0 0
      %577 = vmatprep.subr.bf16.mxu0 0
      %578 = vmatpush1.bf16.msra.mxu0 0
      %579 = vmatprep.subr.bf16.mxu0 0
      %580 = vmatpush1.bf16.msra.mxu0 0
      %581 = vmatprep.mubr.bf16.mxu0 0
      %582 = vmatmul.mubr.bf16.gmra.mrb[0].mxu0 %v470
      %v583 = vpop.f32.mrb[0].mxu0
      %v584 = vadd.f32 %v499, %v583
      %v585 = vpop.f32.mrb[0].mxu0
      %v586 = vpop.f32.mrb[0].mxu0
      %v587 = vadd.f32 %v499, %v586
      %v588 = vpop.f32.mrb[0].mxu0
      %589 = vmatprep.mubr.bf16.mxu0 0
      %590 = vmatmul.mubr.bf16.gmra.mrb[0].mxu0 %v471
      %v591 = vpop.f32.mrb[0].mxu0
      %v592 = vadd.f32 %v499, %v591
      %v593 = vpop.f32.mrb[0].mxu0
      %v594 = vpop.f32.mrb[0].mxu0
      %v595 = vadd.f32 %v499, %v594
      %v596 = vpop.f32.mrb[0].mxu0
      %597 = vmatprep.mubr.bf16.mxu0 0
      %598 = vmatmul.mubr.bf16.gmra.mrb[0].mxu0 %v472
      %v599 = vpop.f32.mrb[0].mxu0
      %v600 = vadd.f32 %v499, %v599
      %v601 = vpop.f32.mrb[0].mxu0
      %v602 = vpop.f32.mrb[0].mxu0
      %v603 = vadd.f32 %v499, %v602
      %v604 = vpop.f32.mrb[0].mxu0
      %605 = vmatprep.mubr.bf16.mxu0 0
      %606 = vmatmul.mubr.bf16.gmra.mrb[0].mxu0 %v473
      %v607 = vpop.f32.mrb[0].mxu0
      %v608 = vadd.f32 %v499, %v607
      %v609 = vpop.f32.mrb[0].mxu0
      %v610 = vpop.f32.mrb[0].mxu0
      %v611 = vadd.f32 %v499, %v610
      %v612 = vpop.f32.mrb[0].mxu0
      %613 = vmatprep.mubr.bf16.mxu0 0
      %614 = vmatmul.mubr.bf16.gmra.mrb[0].mxu0 %v474
      %v615 = vpop.f32.mrb[0].mxu0
      %v616 = vadd.f32 %v499, %v615
      %v617 = vpop.f32.mrb[0].mxu0
      %v618 = vpop.f32.mrb[0].mxu0
      %v619 = vadd.f32 %v499, %v618
      %v620 = vpop.f32.mrb[0].mxu0
      %621 = vmatprep.mubr.bf16.mxu0 0
      %622 = vmatmul.mubr.bf16.gmra.mrb[0].mxu0 %v475
      %v623 = vpop.f32.mrb[0].mxu0
      %v624 = vadd.f32 %v499, %v623
      %v625 = vpop.f32.mrb[0].mxu0
      %v626 = vpop.f32.mrb[0].mxu0
      %v627 = vadd.f32 %v499, %v626
      %v628 = vpop.f32.mrb[0].mxu0
      %629 = vmatprep.mubr.bf16.mxu0 0
      %630 = vmatmul.mubr.bf16.gmra.mrb[0].mxu0 %v476
      %v631 = vpop.f32.mrb[0].mxu0
      %v632 = vadd.f32 %v499, %v631
      %v633 = vpop.f32.mrb[0].mxu0
      %v634 = vpop.f32.mrb[0].mxu0
      %v635 = vadd.f32 %v499, %v634
      %v636 = vpop.f32.mrb[0].mxu0
      %637 = vmatprep.mubr.bf16.mxu0 0
      %638 = vmatmul.mubr.bf16.gmra.mrb[0].mxu0 %v477
      %v639 = vpop.f32.mrb[0].mxu0
      %v640 = vadd.f32 %v499, %v639
      %v641 = vpop.f32.mrb[0].mxu0
      %v642 = vpop.f32.mrb[0].mxu0
      %v643 = vadd.f32 %v499, %v642
      %v644 = vpop.f32.mrb[0].mxu0
      %645 = vdwg.mxu0
      %v646 = vtanh.pop %v584
      %v647 = vtanh.pop %v587
      %v648 = vtanh.pop %v592
      %v649 = vtanh.pop %v595
      %v650 = vtanh.pop %v600
      %v651 = vtanh.pop %v603
      %v652 = vtanh.pop %v608
      %v653 = vtanh.pop %v611
      %v654 = vtanh.pop %v616
      %v655 = vtanh.pop %v619
      %v656 = vtanh.pop %v624
      %v657 = vtanh.pop %v627
      %v658 = vtanh.pop %v632
      %v659 = vtanh.pop %v635
      %v660 = vtanh.pop %v640
      %v661 = vtanh.pop %v643
      %v662 = vadd.f32 %v646, %v454
      %v663 = vadd.f32 %v647, %v455
      %v664 = vadd.f32 %v648, %v456
      %v665 = vadd.f32 %v649, %v457
      %v666 = vadd.f32 %v650, %v458
      %v667 = vadd.f32 %v651, %v459
      %v668 = vadd.f32 %v652, %v460
      %v669 = vadd.f32 %v653, %v461
      %v670 = vadd.f32 %v654, %v462
      %v671 = vadd.f32 %v655, %v463
      %v672 = vadd.f32 %v656, %v464
      %v673 = vadd.f32 %v657, %v465
      %v674 = vadd.f32 %v658, %v466
      %v675 = vadd.f32 %v659, %v467
      %v676 = vadd.f32 %v660, %v468
      %v677 = vadd.f32 %v661, %v469
      %v678 = vld [vmem:[%s5] sm:$0x1]
      %v680 = vlaneseq
      %v681 = vshrl.u32 %v680, 7
      %v682 = vsub.s32 0, %v681
      %v683 = vrot.slane %v678, %v682
      %v685 = vmul.f32 %v662, %v683
      %v686 = vmul.f32 %v663, %v683
      %v687 = vmul.f32 %v664, %v683
      %v688 = vmul.f32 %v665, %v683
      %v689 = vmul.f32 %v666, %v683
      %v690 = vmul.f32 %v667, %v683
      %v691 = vmul.f32 %v668, %v683
      %v692 = vmul.f32 %v669, %v683
      %v693 = vmul.f32 %v670, %v683
      %v694 = vmul.f32 %v671, %v683
      %v695 = vmul.f32 %v672, %v683
      %v696 = vmul.f32 %v673, %v683
      %v697 = vmul.f32 %v674, %v683
      %v698 = vmul.f32 %v675, %v683
      %v699 = vmul.f32 %v676, %v683
      %v700 = vmul.f32 %v677, %v683
      %701 = vadd.xlane.f32.xlu0 %v685
      %v702 = vpop.xlane.xlu0 %701
      %703 = vadd.xlane.f32.xlu0 %v686
      %v704 = vpop.xlane.xlu0 %703
      %705 = vadd.xlane.f32.xlu0 %v687
      %v706 = vpop.xlane.xlu0 %705
      %707 = vadd.xlane.f32.xlu0 %v688
      %v708 = vpop.xlane.xlu0 %707
      %709 = vadd.xlane.f32.xlu0 %v689
      %v710 = vpop.xlane.xlu0 %709
      %711 = vadd.xlane.f32.xlu0 %v690
      %v712 = vpop.xlane.xlu0 %711
      %713 = vadd.xlane.f32.xlu0 %v691
      %v714 = vpop.xlane.xlu0 %713
      %715 = vadd.xlane.f32.xlu0 %v692
      %v716 = vpop.xlane.xlu0 %715
      %717 = vadd.xlane.f32.xlu0 %v693
      %v718 = vpop.xlane.xlu0 %717
      %719 = vadd.xlane.f32.xlu0 %v694
      %v720 = vpop.xlane.xlu0 %719
      %721 = vadd.xlane.f32.xlu0 %v695
      %v722 = vpop.xlane.xlu0 %721
      %723 = vadd.xlane.f32.xlu0 %v696
      %v724 = vpop.xlane.xlu0 %723
      %725 = vadd.xlane.f32.xlu0 %v697
      %v726 = vpop.xlane.xlu0 %725
      %727 = vadd.xlane.f32.xlu0 %v698
      %v728 = vpop.xlane.xlu0 %727
      %729 = vadd.xlane.f32.xlu0 %v699
      %v730 = vpop.xlane.xlu0 %729
      %731 = vadd.xlane.f32.xlu0 %v700
      %v732 = vpop.xlane.xlu0 %731
      %v733 = vld [vmem:[#allocation2] sm:$0x1]
      %v735 = vlaneseq
      %v736 = vshrl.u32 %v735, 7
      %v737 = vsub.s32 0, %v736
      %v738 = vrot.slane %v733, %v737
      %v740 = vadd.f32 %v702, %v738
      %v741 = vadd.f32 %v704, %v738
      %v742 = vadd.f32 %v706, %v738
      %v743 = vadd.f32 %v708, %v738
      %v744 = vadd.f32 %v710, %v738
      %v745 = vadd.f32 %v712, %v738
      %v746 = vadd.f32 %v714, %v738
      %v747 = vadd.f32 %v716, %v738
      %v748 = vadd.f32 %v718, %v738
      %v749 = vadd.f32 %v720, %v738
      %v750 = vadd.f32 %v722, %v738
      %v751 = vadd.f32 %v724, %v738
      %v752 = vadd.f32 %v726, %v738
      %v753 = vadd.f32 %v728, %v738
      %v754 = vadd.f32 %v730, %v738
      %v755 = vadd.f32 %v732, %v738
      %v756 = vsub.f32 0.0, %v740
      %v757 = vsub.f32 0.0, %v741
      %v758 = vsub.f32 0.0, %v742
      %v759 = vsub.f32 0.0, %v743
      %v760 = vsub.f32 0.0, %v744
      %v761 = vsub.f32 0.0, %v745
      %v762 = vsub.f32 0.0, %v746
      %v763 = vsub.f32 0.0, %v747
      %v764 = vsub.f32 0.0, %v748
      %v765 = vsub.f32 0.0, %v749
      %v766 = vsub.f32 0.0, %v750
      %v767 = vsub.f32 0.0, %v751
      %v768 = vsub.f32 0.0, %v752
      %v769 = vsub.f32 0.0, %v753
      %v770 = vsub.f32 0.0, %v754
      %v771 = vsub.f32 0.0, %v755
      %v772 = vmul.f32 %v756, 1.442695
      %v773 = vpow.pop %v772
      %v774 = vmul.f32 %v757, 1.442695
      %v775 = vpow.pop %v774
      %v776 = vmul.f32 %v758, 1.442695
      %v777 = vpow.pop %v776
      %v778 = vmul.f32 %v759, 1.442695
      %v779 = vpow.pop %v778
      %v780 = vmul.f32 %v760, 1.442695
      %v781 = vpow.pop %v780
      %v782 = vmul.f32 %v761, 1.442695
      %v783 = vpow.pop %v782
      %v784 = vmul.f32 %v762, 1.442695
      %v785 = vpow.pop %v784
      %v786 = vmul.f32 %v763, 1.442695
      %v787 = vpow.pop %v786
      %v788 = vmul.f32 %v764, 1.442695
      %v789 = vpow.pop %v788
      %v790 = vmul.f32 %v765, 1.442695
      %v791 = vpow.pop %v790
      %v792 = vmul.f32 %v766, 1.442695
      %v793 = vpow.pop %v792
      %v794 = vmul.f32 %v767, 1.442695
      %v795 = vpow.pop %v794
      %v796 = vmul.f32 %v768, 1.442695
      %v797 = vpow.pop %v796
      %v798 = vmul.f32 %v769, 1.442695
      %v799 = vpow.pop %v798
      %v800 = vmul.f32 %v770, 1.442695
      %v801 = vpow.pop %v800
      %v802 = vmul.f32 %v771, 1.442695
      %v803 = vpow.pop %v802
      %v804 = vadd.f32 %v773, 1.0
      %v805 = vadd.f32 %v775, 1.0
      %v806 = vadd.f32 %v777, 1.0
      %v807 = vadd.f32 %v779, 1.0
      %v808 = vadd.f32 %v781, 1.0
      %v809 = vadd.f32 %v783, 1.0
      %v810 = vadd.f32 %v785, 1.0
      %v811 = vadd.f32 %v787, 1.0
      %v812 = vadd.f32 %v789, 1.0
      %v813 = vadd.f32 %v791, 1.0
      %v814 = vadd.f32 %v793, 1.0
      %v815 = vadd.f32 %v795, 1.0
      %v816 = vadd.f32 %v797, 1.0
      %v817 = vadd.f32 %v799, 1.0
      %v818 = vadd.f32 %v801, 1.0
      %v819 = vadd.f32 %v803, 1.0
      %v820 = vrcp.pop %v804
      %v821 = vrcp.pop %v805
      %v822 = vrcp.pop %v806
      %v823 = vrcp.pop %v807
      %v824 = vrcp.pop %v808
      %v825 = vrcp.pop %v809
      %v826 = vrcp.pop %v810
      %v827 = vrcp.pop %v811
      %v828 = vrcp.pop %v812
      %v829 = vrcp.pop %v813
      %v830 = vrcp.pop %v814
      %v831 = vrcp.pop %v815
      %v832 = vrcp.pop %v816
      %v833 = vrcp.pop %v817
      %v834 = vrcp.pop %v818
      %v835 = vrcp.pop %v819
      %852 = vrot.lane.b32.xlu0 %v285, 112
      %v853 = vpop.permute.xlu0 %852
      %854 = vrot.lane.b32.xlu0 %v286, 112
      %v855 = vpop.permute.xlu0 %854
      %856 = vrot.lane.b32.xlu0 %v287, 112
      %v857 = vpop.permute.xlu0 %856
      %858 = vrot.lane.b32.xlu0 %v288, 112
      %v859 = vpop.permute.xlu0 %858
      %860 = vrot.lane.b32.xlu0 %v289, 112
      %v861 = vpop.permute.xlu0 %860
      %862 = vrot.lane.b32.xlu0 %v290, 112
      %v863 = vpop.permute.xlu0 %862
      %864 = vrot.lane.b32.xlu0 %v291, 112
      %v865 = vpop.permute.xlu0 %864
      %866 = vrot.lane.b32.xlu0 %v292, 112
      %v867 = vpop.permute.xlu0 %866
      %868 = vrot.lane.b32.xlu0 %v293, 112
      %v869 = vpop.permute.xlu0 %868
      %870 = vrot.lane.b32.xlu0 %v294, 112
      %v871 = vpop.permute.xlu0 %870
      %872 = vrot.lane.b32.xlu0 %v295, 112
      %v873 = vpop.permute.xlu0 %872
      %874 = vrot.lane.b32.xlu0 %v296, 112
      %v875 = vpop.permute.xlu0 %874
      %876 = vrot.lane.b32.xlu0 %v297, 112
      %v877 = vpop.permute.xlu0 %876
      %878 = vrot.lane.b32.xlu0 %v298, 112
      %v879 = vpop.permute.xlu0 %878
      %880 = vrot.lane.b32.xlu0 %v299, 112
      %v881 = vpop.permute.xlu0 %880
      %882 = vrot.lane.b32.xlu0 %v300, 112
      %v883 = vpop.permute.xlu0 %882
      %v900 = vsub.f32 %v285, %v853
      %v901 = vsub.f32 %v286, %v855
      %v902 = vsub.f32 %v287, %v857
      %v903 = vsub.f32 %v288, %v859
      %v904 = vsub.f32 %v289, %v861
      %v905 = vsub.f32 %v290, %v863
      %v906 = vsub.f32 %v291, %v865
      %v907 = vsub.f32 %v292, %v867
      %v908 = vsub.f32 %v293, %v869
      %v909 = vsub.f32 %v294, %v871
      %v910 = vsub.f32 %v295, %v873
      %v911 = vsub.f32 %v296, %v875
      %v912 = vsub.f32 %v297, %v877
      %v913 = vsub.f32 %v298, %v879
      %v914 = vsub.f32 %v299, %v881
      %v915 = vsub.f32 %v300, %v883
      %932 = vrot.lane.b32.xlu0 %v820, 15
      %v933 = vpop.permute.xlu0 %932
      %934 = vrot.lane.b32.xlu0 %v821, 15
      %v935 = vpop.permute.xlu0 %934
      %936 = vrot.lane.b32.xlu0 %v822, 15
      %v937 = vpop.permute.xlu0 %936
      %938 = vrot.lane.b32.xlu0 %v823, 15
      %v939 = vpop.permute.xlu0 %938
      %940 = vrot.lane.b32.xlu0 %v824, 15
      %v941 = vpop.permute.xlu0 %940
      %942 = vrot.lane.b32.xlu0 %v825, 15
      %v943 = vpop.permute.xlu0 %942
      %944 = vrot.lane.b32.xlu0 %v826, 15
      %v945 = vpop.permute.xlu0 %944
      %946 = vrot.lane.b32.xlu0 %v827, 15
      %v947 = vpop.permute.xlu0 %946
      %948 = vrot.lane.b32.xlu0 %v828, 15
      %v949 = vpop.permute.xlu0 %948
      %950 = vrot.lane.b32.xlu0 %v829, 15
      %v951 = vpop.permute.xlu0 %950
      %952 = vrot.lane.b32.xlu0 %v830, 15
      %v953 = vpop.permute.xlu0 %952
      %954 = vrot.lane.b32.xlu0 %v831, 15
      %v955 = vpop.permute.xlu0 %954
      %956 = vrot.lane.b32.xlu0 %v832, 15
      %v957 = vpop.permute.xlu0 %956
      %958 = vrot.lane.b32.xlu0 %v833, 15
      %v959 = vpop.permute.xlu0 %958
      %960 = vrot.lane.b32.xlu0 %v834, 15
      %v961 = vpop.permute.xlu0 %960
      %962 = vrot.lane.b32.xlu0 %v835, 15
      %v963 = vpop.permute.xlu0 %962
      %v980 = vmul.f32 %v900, %v933
      %v981 = vmul.f32 %v901, %v935
      %v982 = vmul.f32 %v902, %v937
      %v983 = vmul.f32 %v903, %v939
      %v984 = vmul.f32 %v904, %v941
      %v985 = vmul.f32 %v905, %v943
      %v986 = vmul.f32 %v906, %v945
      %v987 = vmul.f32 %v907, %v947
      %v988 = vmul.f32 %v908, %v949
      %v989 = vmul.f32 %v909, %v951
      %v990 = vmul.f32 %v910, %v953
      %v991 = vmul.f32 %v911, %v955
      %v992 = vmul.f32 %v912, %v957
      %v993 = vmul.f32 %v913, %v959
      %v994 = vmul.f32 %v914, %v961
      %v995 = vmul.f32 %v915, %v963
      %1012 = vrot.lane.b32.xlu0 %v980, 16
      %v1013 = vpop.permute.xlu0 %1012
      %1014 = vrot.lane.b32.xlu0 %v981, 16
      %v1015 = vpop.permute.xlu0 %1014
      %1016 = vrot.lane.b32.xlu0 %v982, 16
      %v1017 = vpop.permute.xlu0 %1016
      %1018 = vrot.lane.b32.xlu0 %v983, 16
      %v1019 = vpop.permute.xlu0 %1018
      %1020 = vrot.lane.b32.xlu0 %v984, 16
      %v1021 = vpop.permute.xlu0 %1020
      %1022 = vrot.lane.b32.xlu0 %v985, 16
      %v1023 = vpop.permute.xlu0 %1022
      %1024 = vrot.lane.b32.xlu0 %v986, 16
      %v1025 = vpop.permute.xlu0 %1024
      %1026 = vrot.lane.b32.xlu0 %v987, 16
      %v1027 = vpop.permute.xlu0 %1026
      %1028 = vrot.lane.b32.xlu0 %v988, 16
      %v1029 = vpop.permute.xlu0 %1028
      %1030 = vrot.lane.b32.xlu0 %v989, 16
      %v1031 = vpop.permute.xlu0 %1030
      %1032 = vrot.lane.b32.xlu0 %v990, 16
      %v1033 = vpop.permute.xlu0 %1032
      %1034 = vrot.lane.b32.xlu0 %v991, 16
      %v1035 = vpop.permute.xlu0 %1034
      %1036 = vrot.lane.b32.xlu0 %v992, 16
      %v1037 = vpop.permute.xlu0 %1036
      %1038 = vrot.lane.b32.xlu0 %v993, 16
      %v1039 = vpop.permute.xlu0 %1038
      %1040 = vrot.lane.b32.xlu0 %v994, 16
      %v1041 = vpop.permute.xlu0 %1040
      %1042 = vrot.lane.b32.xlu0 %v995, 16
      %v1043 = vpop.permute.xlu0 %1042
      %v1060 = vadd.f32 %v285, %v1013
      %v1061 = vadd.f32 %v286, %v1015
      %v1062 = vadd.f32 %v287, %v1017
      %v1063 = vadd.f32 %v288, %v1019
      %v1064 = vadd.f32 %v289, %v1021
      %v1065 = vadd.f32 %v290, %v1023
      %v1066 = vadd.f32 %v291, %v1025
      %v1067 = vadd.f32 %v292, %v1027
      %v1068 = vadd.f32 %v293, %v1029
      %v1069 = vadd.f32 %v294, %v1031
      %v1070 = vadd.f32 %v295, %v1033
      %v1071 = vadd.f32 %v296, %v1035
      %v1072 = vadd.f32 %v297, %v1037
      %v1073 = vadd.f32 %v298, %v1039
      %v1074 = vadd.f32 %v299, %v1041
      %v1075 = vadd.f32 %v300, %v1043
      %1092 = vrot.lane.b32.xlu0 %v1060, 97
      %v1093 = vpop.permute.xlu0 %1092
      %1094 = vrot.lane.b32.xlu0 %v1061, 97
      %v1095 = vpop.permute.xlu0 %1094
      %1096 = vrot.lane.b32.xlu0 %v1062, 97
      %v1097 = vpop.permute.xlu0 %1096
      %1098 = vrot.lane.b32.xlu0 %v1063, 97
      %v1099 = vpop.permute.xlu0 %1098
      %1100 = vrot.lane.b32.xlu0 %v1064, 97
      %v1101 = vpop.permute.xlu0 %1100
      %1102 = vrot.lane.b32.xlu0 %v1065, 97
      %v1103 = vpop.permute.xlu0 %1102
      %1104 = vrot.lane.b32.xlu0 %v1066, 97
      %v1105 = vpop.permute.xlu0 %1104
      %1106 = vrot.lane.b32.xlu0 %v1067, 97
      %v1107 = vpop.permute.xlu0 %1106
      %1108 = vrot.lane.b32.xlu0 %v1068, 97
      %v1109 = vpop.permute.xlu0 %1108
      %1110 = vrot.lane.b32.xlu0 %v1069, 97
      %v1111 = vpop.permute.xlu0 %1110
      %1112 = vrot.lane.b32.xlu0 %v1070, 97
      %v1113 = vpop.permute.xlu0 %1112
      %1114 = vrot.lane.b32.xlu0 %v1071, 97
      %v1115 = vpop.permute.xlu0 %1114
      %1116 = vrot.lane.b32.xlu0 %v1072, 97
      %v1117 = vpop.permute.xlu0 %1116
      %1118 = vrot.lane.b32.xlu0 %v1073, 97
      %v1119 = vpop.permute.xlu0 %1118
      %1120 = vrot.lane.b32.xlu0 %v1074, 97
      %v1121 = vpop.permute.xlu0 %1120
      %1122 = vrot.lane.b32.xlu0 %v1075, 97
      %v1123 = vpop.permute.xlu0 %1122
      %vm1140 = vcmask 7168
      %1141 = vst.msk [vmem:[%s282] sm:$0xff] %vm1140, %v1093
      %1142 = vst.msk [vmem:[%s282 + $0x8] sm:$0xff] %vm1140, %v1095
      %1143 = vst.msk [vmem:[%s282 + $0x10] sm:$0xff] %vm1140, %v1097
      %1144 = vst.msk [vmem:[%s282 + $0x18] sm:$0xff] %vm1140, %v1099
      %1145 = vst.msk [vmem:[%s282 + $0x20] sm:$0xff] %vm1140, %v1101
      %1146 = vst.msk [vmem:[%s282 + $0x28] sm:$0xff] %vm1140, %v1103
      %1147 = vst.msk [vmem:[%s282 + $0x30] sm:$0xff] %vm1140, %v1105
      %1148 = vst.msk [vmem:[%s282 + $0x38] sm:$0xff] %vm1140, %v1107
      %1149 = vst.msk [vmem:[%s282 + $0x40] sm:$0xff] %vm1140, %v1109
      %1150 = vst.msk [vmem:[%s282 + $0x48] sm:$0xff] %vm1140, %v1111
      %1151 = vst.msk [vmem:[%s282 + $0x50] sm:$0xff] %vm1140, %v1113
      %1152 = vst.msk [vmem:[%s282 + $0x58] sm:$0xff] %vm1140, %v1115
      %1153 = vst.msk [vmem:[%s282 + $0x60] sm:$0xff] %vm1140, %v1117
      %1154 = vst.msk [vmem:[%s282 + $0x68] sm:$0xff] %vm1140, %v1119
      %1155 = vst.msk [vmem:[%s282 + $0x70] sm:$0xff] %vm1140, %v1121
      %1156 = vst.msk [vmem:[%s282 + $0x78] sm:$0xff] %vm1140, %v1123
      %s1157 = smul.u32 16, %s20
      %p1158 = scmp.lt.s32.totalorder %s1157, 63
      %s1159 = scalar_select %p1158, %s1157, 63
      %s1160 = smul.addr %s1159, 8
      %s1161 = scalar_lea.vmem %s7, %s1160
      // Predicated region
      $region49: #{tpu_custom_call.1} parent=47 // pred_check
        %p1162 = pneg %p190
      $region50: #{tpu_custom_call.1} parent=47 // pred_check_branch
        %1164 = sbr.rel (%p1162) target = $region52
      $region51: #{tpu_custom_call.1} parent=47 // pred_region
        %s1165 = smul.u32 16, %s20
      $region52: #{tpu_custom_call.1} parent=47 // pred_fallthru
        _
    $region48: #{tpu_custom_call.1} parent=5 // pred_fallthru
      _
    %p1166 = scmp.le.s32.totalorder 2, %s15
    // Predicated region
    $region53: #{tpu_custom_call.1} parent=5 // pred_check
      %p1167 = pneg %p1166
    $region54: #{tpu_custom_call.1} parent=5 // pred_check_branch
      %1169 = sbr.rel (%p1167) target = $region56
    $region55: #{tpu_custom_call.1} parent=5 // pred_region
      %s1170 = ssub.s32 %s15, 2
      // Predicated region
      $region57: #{tpu_custom_call.1} parent=55 // pred_check
        %p1171 = pneg %p196
      $region58: #{tpu_custom_call.1} parent=55 // pred_check_branch
        %1173 = sbr.rel (%p1171) target = $region60
      $region59: #{tpu_custom_call.1} parent=55 // pred_region
        %s1174 = smul.u32 16, %s21
        %p1175 = scmp.lt.s32.totalorder %s1174, 63
        %s1176 = scalar_select %p1175, %s1174, 63
        %s1177 = smul.addr %s1176, 8
        %s1178 = scalar_lea.vmem %s7, %s1177
      $region60: #{tpu_custom_call.1} parent=55 // pred_fallthru
        _
    $region56: #{tpu_custom_call.1} parent=5 // pred_fallthru
      _
  $region6: #{tpu_custom_call.1} parent=0 // loop_footer
    %s19 = sadd.s32 1, %s15
  $region7: #{tpu_custom_call.1} parent=0 // loop_footer_branch
    %14 = sbr.rel target = $region3
  $region8: #{tpu_custom_call.1} parent=0 // loop_exit
    _

</llo_original>
